<compile_context>
chip_gen: v5e
topology: v5e:2x2
jax: 0.10.0
libtpu: 0.0.40
codegen_flags: <defaults>
</compile_context>

<pallas_src>
import functools
import math

import jax
import jax.numpy as jnp
from jax.experimental import pallas as pl
from jax.experimental.pallas import tpu as pltpu


def _dup_matmul(x, d):
    """Exact `x @ d` for a 0/1 bf16 matrix `d` (each column has exactly one 1).

    bf16 x : single MXU pass (1.0 * x accumulated in f32 -> exact).
    other floats: upcast to f32, split into three exact bf16 pieces and sum three
    default-precision passes -> reconstructs the f32 value exactly (no HIGHEST).
    """
    if x.dtype == jnp.bfloat16:
        return jnp.dot(x, d, preferred_element_type=jnp.float32)
    xf = x.astype(jnp.float32)
    hi = xf.astype(jnp.bfloat16)
    r1 = xf - hi.astype(jnp.float32)
    mid = r1.astype(jnp.bfloat16)
    lo = (r1 - mid.astype(jnp.float32)).astype(jnp.bfloat16)
    out = jnp.dot(hi, d, preferred_element_type=jnp.float32)
    out = out + jnp.dot(mid, d, preferred_element_type=jnp.float32)
    out = out + jnp.dot(lo, d, preferred_element_type=jnp.float32)
    return out


def _upsample_flat_kernel(x_ref, d_ref, o_ref):
    """W < 128 path: combined operator emits the block in final order, one store."""
    o_ref[...] = _dup_matmul(x_ref[...], d_ref[...]).astype(o_ref.dtype)


def _upsample_chunk_kernel(x_ref, d_ref, o_ref, *, width, chunk):
    """W >= 128 path: column-dup per lane-aligned chunk on the MXU, row-dup by
    storing the chunk into both halves of the (tr, 4W) output row (data movement
    only - no row-duplication matmul)."""
    d_full = d_ref[...]
    two_w = 2 * width
    c0 = 0
    while c0 < width:  # static trace-time loop
        cs = min(chunk, width - c0)
        d = d_full if cs == chunk else d_full[:cs, :2 * cs]
        y = _dup_matmul(x_ref[:, c0:c0 + cs], d).astype(o_ref.dtype)
        o_ref[:, 2 * c0:2 * c0 + 2 * cs] = y            # output row 2r segment
        o_ref[:, two_w + 2 * c0:two_w + 2 * c0 + 2 * cs] = y  # row 2r+1 segment
        c0 += cs


def _pick_group(rows, width):
    """Pick k (a divisor of `rows`) image rows to flatten per matmul row so the
    lane dim k*width is >=128 (lane-dense) but <=256 (stays HBM-bound)."""
    if width >= 128:
        return 1
    k0 = -(-128 // width)
    upper = min(rows, max(k0, 256 // width))
    for k in range(k0, upper + 1):
        if rows % k == 0:
            return k
    return 1


def upsample_nearest_2x(x, *, row_target=1024, chunk=128):
    """Nearest-neighbour 2x upsample of the last two dims: (..., H, W) -> (..., 2H, 2W)."""
    orig_shape = x.shape
    if x.ndim < 2:
        raise ValueError("expected input with at least 2 dims (..., H, W)")
    H, W = orig_shape[-2], orig_shape[-1]
    dtype = x.dtype

    if not jnp.issubdtype(dtype, jnp.floating):
        # TODO(synk): no exact MXU duplication path for ints/bools; exact XLA fallback.
        return jnp.repeat(jnp.repeat(x, 2, axis=-2), 2, axis=-1)

    lead = math.prod(orig_shape[:-2])
    R = lead * H
    itemsize = jnp.dtype(dtype).itemsize
    passes = 1 if dtype == jnp.bfloat16 else 3

    if W < 128:
        # Lane-density fix for small spatial widths: pack k image rows per row.
        k = _pick_group(R, W)
        R2, C2 = R // k, k * W
        x2 = x.reshape(R2, C2)
        # Combined 0/1 operator: duplicates along W and lays both row copies out
        # in final row-major order, so (R2, 4*C2) is a free reshape of the result.
        q = jnp.arange(4 * C2, dtype=jnp.int32)
        src = (q // (4 * W)) * W + ((q % (2 * W)) // 2)
        dmat = (jnp.arange(C2, dtype=jnp.int32)[:, None] == src[None, :]
                ).astype(jnp.bfloat16)
        kernel = _upsample_flat_kernel
        macs = passes * R2 * C2 * 4 * C2
    else:
        # One full image row per matmul row; 128-wide column-dup chunks + dual store.
        R2, C2 = R, W
        x2 = x.reshape(R2, C2)
        p = jnp.arange(chunk, dtype=jnp.int32)[:, None]
        q = jnp.arange(2 * chunk, dtype=jnp.int32)[None, :]
        dmat = (p == q // 2).astype(jnp.bfloat16)
        kernel = functools.partial(_upsample_chunk_kernel, width=W, chunk=chunk)
        full, rem = divmod(W, chunk)
        macs = passes * R2 * 2 * (full * chunk * chunk + rem * rem)

    # Row tile: as big as an ~8 MiB/buffer-set budget allows (amortizes the
    # ~0.35us/step overhead), 8-aligned, and split so the grid has >=2 programs
    # when possible (both v7x TensorCores); fits v7x's 64 MiB VMEM with margin.
    per_row = 5 * C2 * itemsize
    tr = max(8, min(row_target, (8 * 1024 * 1024) // max(per_row, 1)))
    tr = min(tr, R2)
    if tr < R2:
        tr = max(8, (tr // 8) * 8)
    if R2 > 8 and pl.cdiv(R2, tr) < 2:
        tr = max(8, -(-((R2 + 1) // 2) // 8) * 8)
    n_r = pl.cdiv(R2, tr)

    flops = int(2 * macs)
    bytes_accessed = int(5 * R2 * C2 * itemsize + dmat.size * 2)

    out2 = pl.pallas_call(
        kernel,
        out_shape=jax.ShapeDtypeStruct((R2, 4 * C2), dtype),
        grid_spec=pltpu.PrefetchScalarGridSpec(
            num_scalar_prefetch=0,
            grid=(n_r,),
            in_specs=[
                pl.BlockSpec((tr, C2), lambda i: (i, 0)),
                # Constant 0/1 operator (64-512 KiB): block index never changes,
                # DMA'd once and VMEM-resident for the whole grid.
                pl.BlockSpec(dmat.shape, lambda i: (0, 0)),
            ],
            out_specs=pl.BlockSpec((tr, 4 * C2), lambda i: (i, 0)),
        ),
        compiler_params=pltpu.CompilerParams(
            dimension_semantics=("parallel",),
            vmem_limit_bytes=32 * 1024 * 1024,
        ),
        cost_estimate=pl.CostEstimate(
            flops=flops, transcendentals=0, bytes_accessed=bytes_accessed),
    )(x2, dmat)

    return out2.reshape(orig_shape[:-2] + (2 * H, 2 * W))


class UpsampleLayer:
    """JAX/Pallas equivalent of the PyTorch UpsampleLayer module (eval forward)."""

    def __call__(self, x):
        return upsample_nearest_2x(x)


if __name__ == "__main__":
    layer = UpsampleLayer()
    key = jax.random.PRNGKey(0)

    # Required small NCHW case (W < 128 -> flattened lane-dense path), f32.
    x = jax.random.normal(key, (2, 4, 16, 16), dtype=jnp.float32)
    y = jax.jit(layer.__call__)(x)
    jax.block_until_ready(y)
    assert y.shape == (2, 4, 32, 32), y.shape
    ref = jnp.repeat(jnp.repeat(x, 2, axis=2), 2, axis=3)
    assert jnp.allclose(y, ref, rtol=1e-6, atol=1e-6), float(jnp.max(jnp.abs(y - ref)))

    # bf16 input: single-pass MXU duplication (exact).
    xb = x.astype(jnp.bfloat16)
    yb = jax.jit(layer.__call__)(xb)
    jax.block_until_ready(yb)
    refb = jnp.repeat(jnp.repeat(xb, 2, axis=2), 2, axis=3)
    assert yb.dtype == jnp.bfloat16 and bool(jnp.array_equal(yb, refb))

    # Wide-row case (W >= 128): chunked column-dup + dual-store row-dup path.
    xw = jax.random.normal(jax.random.PRNGKey(1), (2, 2, 8, 128), dtype=jnp.float32)
    yw = jax.jit(layer.__call__)(xw)
    jax.block_until_ready(yw)
    assert yw.shape == (2, 2, 16, 256), yw.shape
    refw = jnp.repeat(jnp.repeat(xw, 2, axis=2), 2, axis=3)
    assert jnp.allclose(yw, refw, rtol=1e-6, atol=1e-6)

    print("KERNEL_OK")
</pallas_src>

<mosaic_0001>
module attributes {stable_mosaic.version = 11 : i64} {
  func.func @_upsample_flat_kernel(%arg0: i32, %arg1: memref<8x128xf32, #tpu.memory_space<vmem>>, %arg2: memref<128x512xbf16, #tpu.memory_space<vmem>>, %arg3: memref<8x512xf32, #tpu.memory_space<vmem>>) attributes {dimension_semantics = [#tpu.dimension_semantics<parallel>], iteration_bounds = array<i64: 2>, scalar_prefetch = 0 : i64, scratch_operands = 0 : i64, tpu.core_type = #tpu.core_type<tc>, window_params = [{transform_indices = @transform_0, window_bounds = array<i64: 8, 128>}, {pipeline_mode = #tpu.pipeline_mode<synchronous>, transform_indices = @transform_1, window_bounds = array<i64: 128, 512>}, {transform_indices = @transform_2, window_bounds = array<i64: 8, 512>}]} {
    %c0 = arith.constant 0 : index
    %c0_0 = arith.constant 0 : index
    %0 = vector.load %arg1[%c0, %c0_0] : memref<8x128xf32, #tpu.memory_space<vmem>>, vector<8x128xf32>
    %c0_1 = arith.constant 0 : index
    %c0_2 = arith.constant 0 : index
    %1 = vector.load %arg2[%c0_1, %c0_2] : memref<128x512xbf16, #tpu.memory_space<vmem>>, vector<128x512xbf16>
    %2 = arith.truncf %0 : vector<8x128xf32> to vector<8x128xbf16>
    %3 = arith.extf %2 : vector<8x128xbf16> to vector<8x128xf32>
    %4 = arith.subf %0, %3 : vector<8x128xf32>
    %5 = arith.truncf %4 : vector<8x128xf32> to vector<8x128xbf16>
    %6 = arith.extf %5 : vector<8x128xbf16> to vector<8x128xf32>
    %7 = arith.subf %4, %6 : vector<8x128xf32>
    %8 = arith.truncf %7 : vector<8x128xf32> to vector<8x128xbf16>
    %cst = arith.constant dense<0.000000e+00> : vector<8x512xf32>
    %9 = tpu.matmul %2, %1, %cst {dimension_numbers = #tpu.dot_dimension_numbers<[1], [0], [0], [1], [0, 0, 1, 1], [], []>} : vector<8x128xbf16>, vector<128x512xbf16>, vector<8x512xf32> -> vector<8x512xf32>
    %cst_3 = arith.constant dense<0.000000e+00> : vector<8x512xf32>
    %10 = tpu.matmul %5, %1, %cst_3 {dimension_numbers = #tpu.dot_dimension_numbers<[1], [0], [0], [1], [0, 0, 1, 1], [], []>} : vector<8x128xbf16>, vector<128x512xbf16>, vector<8x512xf32> -> vector<8x512xf32>
    %11 = arith.addf %9, %10 : vector<8x512xf32>
    %cst_4 = arith.constant dense<0.000000e+00> : vector<8x512xf32>
    %12 = tpu.matmul %8, %1, %cst_4 {dimension_numbers = #tpu.dot_dimension_numbers<[1], [0], [0], [1], [0, 0, 1, 1], [], []>} : vector<8x128xbf16>, vector<128x512xbf16>, vector<8x512xf32> -> vector<8x512xf32>
    %13 = arith.addf %11, %12 : vector<8x512xf32>
    %c0_5 = arith.constant 0 : index
    %c0_6 = arith.constant 0 : index
    %14 = vector.load %arg3[%c0_5, %c0_6] : memref<8x512xf32, #tpu.memory_space<vmem>>, vector<8x512xf32>
    tpu.vector_store %arg3[%c0_5, %c0_6], %13 {strides = array<i32>} : memref<8x512xf32, #tpu.memory_space<vmem>>, vector<8x512xf32>,
    return
  }
  func.func @transform_0(%arg0: i32) -> (i32, i32) {
    %c0_i32 = arith.constant 0 : i32
    %c0_i32_0 = arith.constant 0 : i32
    return %arg0, %c0_i32 : i32, i32
  }
  func.func @transform_1(%arg0: i32) -> (i32, i32) {
    %c0_i32 = arith.constant 0 : i32
    %c0_i32_0 = arith.constant 0 : i32
    %c0_i32_1 = arith.constant 0 : i32
    return %c0_i32, %c0_i32_0 : i32, i32
  }
  func.func @transform_2(%arg0: i32) -> (i32, i32) {
    %c0_i32 = arith.constant 0 : i32
    %c0_i32_0 = arith.constant 0 : i32
    return %arg0, %c0_i32 : i32, i32
  }
}

</mosaic_0001>

<llo_original>
// kernel: a_call__.1
$region0: #{a_call__.1}
  #allocation0 [shape = 'u32[]', space=smem, size = 0x4, offset = 0x4, fixed_abs, tag = 'smem constant byte address 0x4 - core index']
  #allocation1 [shape = 'u32[72,128]{1,0:T(1,128)}', space=vmem, size = 0x9000, scoped, tag = 'internal scratch']
  %s0 = inlined_call_operand.vmem [shape: f32[16,128], index: 0, kind: input, shape index: {}]
  %s1 = inlined_call_operand.vmem [shape: bf16[128,512], index: 1, kind: input, shape index: {}]
  %s2 = inlined_call_operand.vmem [shape: f32[16,512], index: 2, kind: output, shape index: {}]
  %s3 = sld [smem:[#allocation0]]
  $region41: #{a_call__.1} parent=0
    _
  %s5 = ssub.s32 1, %s3
  %s6 = scalar_select 0, %s5, %s3
  loop: start=0, step=1, limit=4
  $region2: #{a_call__.1} parent=0 // loop_pre_header
    _
  $region3: #{a_call__.1} parent=0 // loop_header
    %s8 = sphi 0, %s12
    %p9 = scmp.ge.s32.totalorder %s8, 4
    %s18 = sphi 0, %s20
    %s21 = sphi 0, %s18
    %s22 = sphi 0, %s21
    %s38 = sphi 0, %s22
    %s42 = sphi 0, %s42
    %s44 = sphi 0, %s42
    %s45 = sphi 0, %s44
    %s59 = sphi 0, %s45
    %s65 = sphi 0, %s67
    %s68 = sphi 0, %s65
    %s69 = sphi 0, %s68
    %s85 = sphi 0, %s69
  $region4: #{a_call__.1} parent=0 // loop_header_branch
    %11 = sbr.rel (%p9) target = $region8
  $region5: #{a_call__.1} parent=0 // loop_body
    %s13 = ssub.s32 %s8, 1
    %s14 = ssub.s32 %s8, 2
    %s15 = sadd.s32 %s8, 1
    %s16 = ssub.s32 %s8, %s15
    %p17 = scmp.eq.s32.totalorder %s16, 0
    %s19 = sadd.s32 %s18, 1
    %s20 = scalar_select %p17, %s18, %s19
    %p23 = pneg %p17
    %p24 = scmp.eq.s32.totalorder %s8, 1
    %p25 = por %p23, %p24
    %p26 = scmp.ne.s32.totalorder %s18, %s21
    %p27 = scmp.eq.s32.totalorder %s8, 0
    %p28 = por %p26, %p27
    %p29 = scmp.ne.s32.totalorder %s18, %s21
    %p30 = scmp.eq.s32.totalorder %s13, 1
    %p31 = por %p29, %p30
    %p32 = scmp.ne.s32.totalorder %s21, %s22
    %p33 = scmp.eq.s32.totalorder %s13, 0
    %p34 = por %p32, %p33
    %p35 = scmp.ne.s32.totalorder %s21, %s22
    %p36 = scmp.eq.s32.totalorder %s14, 1
    %p37 = por %p35, %p36
    %p39 = scmp.ne.s32.totalorder %s22, %s38
    %p40 = scmp.eq.s32.totalorder %s14, 0
    %p41 = por %p39, %p40
    %s43 = sadd.s32 %s42, 1
    %p46 = scmp.eq.s32.totalorder %s8, 1
    %p47 = scmp.ne.s32.totalorder %s42, %s44
    %p48 = scmp.eq.s32.totalorder %s8, 0
    %p49 = por %p47, %p48
    %p50 = scmp.ne.s32.totalorder %s42, %s44
    %p51 = scmp.eq.s32.totalorder %s13, 1
    %p52 = por %p50, %p51
    %p53 = scmp.ne.s32.totalorder %s44, %s45
    %p54 = scmp.eq.s32.totalorder %s13, 0
    %p55 = por %p53, %p54
    %p56 = scmp.ne.s32.totalorder %s44, %s45
    %p57 = scmp.eq.s32.totalorder %s14, 1
    %p58 = por %p56, %p57
    %p60 = scmp.ne.s32.totalorder %s45, %s59
    %p61 = scmp.eq.s32.totalorder %s14, 0
    %p62 = por %p60, %p61
    %s63 = ssub.s32 %s8, %s15
    %p64 = scmp.eq.s32.totalorder %s63, 0
    %s66 = sadd.s32 %s65, 1
    %s67 = scalar_select %p64, %s65, %s66
    %p70 = pneg %p64
    %p71 = scmp.eq.s32.totalorder %s8, 1
    %p72 = por %p70, %p71
    %p73 = scmp.ne.s32.totalorder %s65, %s68
    %p74 = scmp.eq.s32.totalorder %s8, 0
    %p75 = por %p73, %p74
    %p76 = scmp.ne.s32.totalorder %s65, %s68
    %p77 = scmp.eq.s32.totalorder %s13, 1
    %p78 = por %p76, %p77
    %p79 = scmp.ne.s32.totalorder %s68, %s69
    %p80 = scmp.eq.s32.totalorder %s13, 0
    %p81 = por %p79, %p80
    %p82 = scmp.ne.s32.totalorder %s68, %s69
    %p83 = scmp.eq.s32.totalorder %s14, 1
    %p84 = por %p82, %p83
    %p86 = scmp.ne.s32.totalorder %s69, %s85
    %p87 = scmp.eq.s32.totalorder %s14, 0
    %p88 = por %p86, %p87
    %p89 = scmp.le.s32.totalorder 1, %s8
    %p90 = scmp.lt.s32.totalorder %s8, 3
    %p91 = pnand %p89, %p90
    %p92 = pneg %p91
    // Predicated region
    $region9: #{a_call__.1} parent=5 // pred_check
      _
    $region10: #{a_call__.1} parent=5 // pred_check_branch
      %94 = sbr.rel (%p91) target = $region12
    $region11: #{a_call__.1} parent=5 // pred_region
      %s95 = ssub.s32 %s8, 1
      // Predicated region
      $region13: #{a_call__.1} parent=11 // pred_check
        %p96 = pneg %p55
      $region14: #{a_call__.1} parent=11 // pred_check_branch
        %98 = sbr.rel (%p96) target = $region16
      $region15: #{a_call__.1} parent=11 // pred_region
        _
      $region16: #{a_call__.1} parent=11 // pred_fallthru
        _
    $region12: #{a_call__.1} parent=5 // pred_fallthru
      _
    %p99 = scmp.lt.s32.totalorder %s8, 2
    // Predicated region
    $region17: #{a_call__.1} parent=5 // pred_check
      %p100 = pneg %p99
    $region18: #{a_call__.1} parent=5 // pred_check_branch
      %102 = sbr.rel (%p100) target = $region20
    $region19: #{a_call__.1} parent=5 // pred_region
      // Predicated region
      $region21: #{a_call__.1} parent=19 // pred_check
        %p103 = pneg %p28
      $region22: #{a_call__.1} parent=19 // pred_check_branch
        %105 = sbr.rel (%p103) target = $region24
      $region23: #{a_call__.1} parent=19 // pred_region
        %p106 = scmp.lt.s32.totalorder %s8, 1
        %s107 = scalar_select %p106, %s8, 1
        %s108 = smul.addr %s107, 8
        %s109 = scalar_lea.vmem %s0, %s108
      $region24: #{a_call__.1} parent=19 // pred_fallthru
        _
    $region20: #{a_call__.1} parent=5 // pred_fallthru
      _
    %p110 = scmp.le.s32.totalorder 1, %s8
    %p111 = scmp.lt.s32.totalorder %s8, 3
    %p112 = pnand %p110, %p111
    %p113 = pneg %p112
    // Predicated region
    $region25: #{a_call__.1} parent=5 // pred_check
      _
    $region26: #{a_call__.1} parent=5 // pred_check_branch
      %115 = sbr.rel (%p112) target = $region28
    $region27: #{a_call__.1} parent=5 // pred_region
      %s116 = ssub.s32 %s8, 1
      %p117 = scmp.lt.s32.totalorder %s13, 1
      %s118 = scalar_select %p117, %s13, 1
      %s119 = smul.addr %s118, 8
      %s120 = scalar_lea.vmem %s0, %s119
      %p121 = pneg %p34
      %p122 = pneg %p31
      %p123 = pneg %p55
      %p124 = pneg %p52
      %p125 = pneg %p81
      %p126 = pneg %p78
      %p127 = scmp.lt.s32.totalorder %s13, 1
      %s128 = scalar_select %p127, %s13, 1
      %s129 = smul.addr %s128, 4
      %s130 = smul.addr %s129, 8
      %s131 = scalar_lea.vmem %s2, %s130
      %p132 = scmp.lt.s32.totalorder %s13, 1
      %s133 = scalar_select %p132, %s13, 1
      %s134 = smul.addr %s133, 8
      %s135 = scalar_lea.vmem %s0, %s134
      %p136 = scmp.lt.s32.totalorder %s13, 1
      %s137 = scalar_select %p136, %s13, 1
      %s138 = smul.addr %s137, 4
      %s139 = smul.addr %s138, 8
      %s140 = scalar_lea.vmem %s2, %s139
      %v141 = vld [vmem:[%s135] sm:$0xff]
      %v142 = vld [vmem:[%s1] sm:$0xff]
      %v143 = vld [vmem:[%s1 + $0x8] sm:$0xff]
      %v144 = vld [vmem:[%s1 + $0x10] sm:$0xff]
      %v145 = vld [vmem:[%s1 + $0x18] sm:$0xff]
      %v146 = vld [vmem:[%s1 + $0x20] sm:$0xff]
      %v147 = vld [vmem:[%s1 + $0x28] sm:$0xff]
      %v148 = vld [vmem:[%s1 + $0x30] sm:$0xff]
      %v149 = vld [vmem:[%s1 + $0x38] sm:$0xff]
      %v150 = vld [vmem:[%s1 + $0x40] sm:$0xff]
      %v151 = vld [vmem:[%s1 + $0x48] sm:$0xff]
      %v152 = vld [vmem:[%s1 + $0x50] sm:$0xff]
      %v153 = vld [vmem:[%s1 + $0x58] sm:$0xff]
      %v154 = vld [vmem:[%s1 + $0x60] sm:$0xff]
      %v155 = vld [vmem:[%s1 + $0x68] sm:$0xff]
      %v156 = vld [vmem:[%s1 + $0x70] sm:$0xff]
      %v157 = vld [vmem:[%s1 + $0x78] sm:$0xff]
      %v158 = vld [vmem:[%s1 + $0x80] sm:$0xff]
      %v159 = vld [vmem:[%s1 + $0x88] sm:$0xff]
      %v160 = vld [vmem:[%s1 + $0x90] sm:$0xff]
      %v161 = vld [vmem:[%s1 + $0x98] sm:$0xff]
      %v162 = vld [vmem:[%s1 + $0xa0] sm:$0xff]
      %v163 = vld [vmem:[%s1 + $0xa8] sm:$0xff]
      %v164 = vld [vmem:[%s1 + $0xb0] sm:$0xff]
      %v165 = vld [vmem:[%s1 + $0xb8] sm:$0xff]
      %v166 = vld [vmem:[%s1 + $0xc0] sm:$0xff]
      %v167 = vld [vmem:[%s1 + $0xc8] sm:$0xff]
      %v168 = vld [vmem:[%s1 + $0xd0] sm:$0xff]
      %v169 = vld [vmem:[%s1 + $0xd8] sm:$0xff]
      %v170 = vld [vmem:[%s1 + $0xe0] sm:$0xff]
      %v171 = vld [vmem:[%s1 + $0xe8] sm:$0xff]
      %v172 = vld [vmem:[%s1 + $0xf0] sm:$0xff]
      %v173 = vld [vmem:[%s1 + $0xf8] sm:$0xff]
      %v174 = vpack.c.bf16 %v141, %v141
      %v175 = vunpack.c.l.bf16 %v174
      %v176 = vsub.f32 %v141, %v175
      %v177 = vpack.c.bf16 %v176, %v176
      %v178 = vunpack.c.l.bf16 %v177
      %v179 = vsub.f32 %v176, %v178
      %v180 = vpack.c.bf16 %v179, %v179
      %v213 = vunpack.c.l.b16 %v142
      %v214 = vunpack.c.h.b16 %v142
      %v215 = vunpack.c.l.b16 %v143
      %v216 = vunpack.c.h.b16 %v143
      %v217 = vunpack.c.l.b16 %v144
      %v218 = vunpack.c.h.b16 %v144
      %v219 = vunpack.c.l.b16 %v145
      %v220 = vunpack.c.h.b16 %v145
      %v221 = vunpack.c.l.b16 %v146
      %v222 = vunpack.c.h.b16 %v146
      %v223 = vunpack.c.l.b16 %v147
      %v224 = vunpack.c.h.b16 %v147
      %v225 = vunpack.c.l.b16 %v148
      %v226 = vunpack.c.h.b16 %v148
      %v227 = vunpack.c.l.b16 %v149
      %v228 = vunpack.c.h.b16 %v149
      %v229 = vunpack.c.l.b16 %v150
      %v230 = vunpack.c.h.b16 %v150
      %v231 = vunpack.c.l.b16 %v151
      %v232 = vunpack.c.h.b16 %v151
      %v233 = vunpack.c.l.b16 %v152
      %v234 = vunpack.c.h.b16 %v152
      %v235 = vunpack.c.l.b16 %v153
      %v236 = vunpack.c.h.b16 %v153
      %v237 = vunpack.c.l.b16 %v154
      %v238 = vunpack.c.h.b16 %v154
      %v239 = vunpack.c.l.b16 %v155
      %v240 = vunpack.c.h.b16 %v155
      %v241 = vunpack.c.l.b16 %v156
      %v242 = vunpack.c.h.b16 %v156
      %v243 = vunpack.c.l.b16 %v157
      %v244 = vunpack.c.h.b16 %v157
      %v245 = vunpack.c.l.b16 %v158
      %v246 = vunpack.c.h.b16 %v158
      %v247 = vunpack.c.l.b16 %v159
      %v248 = vunpack.c.h.b16 %v159
      %v249 = vunpack.c.l.b16 %v160
      %v250 = vunpack.c.h.b16 %v160
      %v251 = vunpack.c.l.b16 %v161
      %v252 = vunpack.c.h.b16 %v161
      %v253 = vunpack.c.l.b16 %v162
      %v254 = vunpack.c.h.b16 %v162
      %v255 = vunpack.c.l.b16 %v163
      %v256 = vunpack.c.h.b16 %v163
      %v257 = vunpack.c.l.b16 %v164
      %v258 = vunpack.c.h.b16 %v164
      %v259 = vunpack.c.l.b16 %v165
      %v260 = vunpack.c.h.b16 %v165
      %v261 = vunpack.c.l.b16 %v166
      %v262 = vunpack.c.h.b16 %v166
      %v263 = vunpack.c.l.b16 %v167
      %v264 = vunpack.c.h.b16 %v167
      %v265 = vunpack.c.l.b16 %v168
      %v266 = vunpack.c.h.b16 %v168
      %v267 = vunpack.c.l.b16 %v169
      %v268 = vunpack.c.h.b16 %v169
      %v269 = vunpack.c.l.b16 %v170
      %v270 = vunpack.c.h.b16 %v170
      %v271 = vunpack.c.l.b16 %v171
      %v272 = vunpack.c.h.b16 %v171
      %v273 = vunpack.c.l.b16 %v172
      %v274 = vunpack.c.h.b16 %v172
      %v275 = vunpack.c.l.b16 %v173
      %v276 = vunpack.c.h.b16 %v173
      %v277 = vpack.c.b16 %v217, %v213
      %v278 = vpack.c.b16 %v218, %v214
      %v279 = vpack.c.b16 %v219, %v215
      %v280 = vpack.c.b16 %v220, %v216
      %v281 = vpack.c.b16 %v225, %v221
      %v282 = vpack.c.b16 %v226, %v222
      %v283 = vpack.c.b16 %v227, %v223
      %v284 = vpack.c.b16 %v228, %v224
      %v285 = vpack.c.b16 %v233, %v229
      %v286 = vpack.c.b16 %v234, %v230
      %v287 = vpack.c.b16 %v235, %v231
      %v288 = vpack.c.b16 %v236, %v232
      %v289 = vpack.c.b16 %v241, %v237
      %v290 = vpack.c.b16 %v242, %v238
      %v291 = vpack.c.b16 %v243, %v239
      %v292 = vpack.c.b16 %v244, %v240
      %v293 = vpack.c.b16 %v249, %v245
      %v294 = vpack.c.b16 %v250, %v246
      %v295 = vpack.c.b16 %v251, %v247
      %v296 = vpack.c.b16 %v252, %v248
      %v297 = vpack.c.b16 %v257, %v253
      %v298 = vpack.c.b16 %v258, %v254
      %v299 = vpack.c.b16 %v259, %v255
      %v300 = vpack.c.b16 %v260, %v256
      %v301 = vpack.c.b16 %v265, %v261
      %v302 = vpack.c.b16 %v266, %v262
      %v303 = vpack.c.b16 %v267, %v263
      %v304 = vpack.c.b16 %v268, %v264
      %v305 = vpack.c.b16 %v273, %v269
      %v306 = vpack.c.b16 %v274, %v270
      %v307 = vpack.c.b16 %v275, %v271
      %v308 = vpack.c.b16 %v276, %v272
      %341 = vmatpush.bf16.msra.mxu0 %v305
      %342 = vmatpush.bf16.msra.mxu0 %v301
      %343 = vmatpush.bf16.msra.mxu0 %v297
      %344 = vmatpush.bf16.msra.mxu0 %v293
      %345 = vmatpush.bf16.msra.mxu0 %v289
      %346 = vmatpush.bf16.msra.mxu0 %v285
      %347 = vmatpush.bf16.msra.mxu0 %v281
      %348 = vmatpush.bf16.msra.mxu0 %v277
      %349 = vmatmul.bf16.gmra.mxu0 %v177
      %v350 = vpop.f32.mrf.mxu0
      %v351 = vadd.f32 0.0, %v350
      %v352 = vpop.f32.mrf.mxu0
      %353 = vdwg.mxu0
      %354 = vmatpush.bf16.msra.mxu0 %v306
      %355 = vmatpush.bf16.msra.mxu0 %v302
      %356 = vmatpush.bf16.msra.mxu0 %v298
      %357 = vmatpush.bf16.msra.mxu0 %v294
      %358 = vmatpush.bf16.msra.mxu0 %v290
      %359 = vmatpush.bf16.msra.mxu0 %v286
      %360 = vmatpush.bf16.msra.mxu0 %v282
      %361 = vmatpush.bf16.msra.mxu0 %v278
      %362 = vmatmul.bf16.gmra.mxu0 %v177
      %v363 = vpop.f32.mrf.mxu0
      %v364 = vadd.f32 0.0, %v363
      %v365 = vpop.f32.mrf.mxu0
      %366 = vdwg.mxu0
      %367 = vmatpush.bf16.msra.mxu0 %v307
      %368 = vmatpush.bf16.msra.mxu0 %v303
      %369 = vmatpush.bf16.msra.mxu0 %v299
      %370 = vmatpush.bf16.msra.mxu0 %v295
      %371 = vmatpush.bf16.msra.mxu0 %v291
      %372 = vmatpush.bf16.msra.mxu0 %v287
      %373 = vmatpush.bf16.msra.mxu0 %v283
      %374 = vmatpush.bf16.msra.mxu0 %v279
      %375 = vmatmul.bf16.gmra.mxu0 %v177
      %v376 = vpop.f32.mrf.mxu0
      %v377 = vadd.f32 0.0, %v376
      %v378 = vpop.f32.mrf.mxu0
      %379 = vdwg.mxu0
      %380 = vmatpush.bf16.msra.mxu0 %v308
      %381 = vmatpush.bf16.msra.mxu0 %v304
      %382 = vmatpush.bf16.msra.mxu0 %v300
      %383 = vmatpush.bf16.msra.mxu0 %v296
      %384 = vmatpush.bf16.msra.mxu0 %v292
      %385 = vmatpush.bf16.msra.mxu0 %v288
      %386 = vmatpush.bf16.msra.mxu0 %v284
      %387 = vmatpush.bf16.msra.mxu0 %v280
      %388 = vmatmul.bf16.gmra.mxu0 %v177
      %v389 = vpop.f32.mrf.mxu0
      %v390 = vadd.f32 0.0, %v389
      %v391 = vpop.f32.mrf.mxu0
      %392 = vdwg.mxu0
      %393 = vmatpush.bf16.msra.mxu0 %v305
      %394 = vmatpush.bf16.msra.mxu0 %v301
      %395 = vmatpush.bf16.msra.mxu0 %v297
      %396 = vmatpush.bf16.msra.mxu0 %v293
      %397 = vmatpush.bf16.msra.mxu0 %v289
      %398 = vmatpush.bf16.msra.mxu0 %v285
      %399 = vmatpush.bf16.msra.mxu0 %v281
      %400 = vmatpush.bf16.msra.mxu0 %v277
      %401 = vmatmul.bf16.gmra.mxu0 %v174
      %v402 = vpop.f32.mrf.mxu0
      %v403 = vadd.f32 %v351, %v402
      %v404 = vpop.f32.mrf.mxu0
      %405 = vdwg.mxu0
      %406 = vmatpush.bf16.msra.mxu0 %v306
      %407 = vmatpush.bf16.msra.mxu0 %v302
      %408 = vmatpush.bf16.msra.mxu0 %v298
      %409 = vmatpush.bf16.msra.mxu0 %v294
      %410 = vmatpush.bf16.msra.mxu0 %v290
      %411 = vmatpush.bf16.msra.mxu0 %v286
      %412 = vmatpush.bf16.msra.mxu0 %v282
      %413 = vmatpush.bf16.msra.mxu0 %v278
      %414 = vmatmul.bf16.gmra.mxu0 %v174
      %v415 = vpop.f32.mrf.mxu0
      %v416 = vadd.f32 %v364, %v415
      %v417 = vpop.f32.mrf.mxu0
      %418 = vdwg.mxu0
      %419 = vmatpush.bf16.msra.mxu0 %v307
      %420 = vmatpush.bf16.msra.mxu0 %v303
      %421 = vmatpush.bf16.msra.mxu0 %v299
      %422 = vmatpush.bf16.msra.mxu0 %v295
      %423 = vmatpush.bf16.msra.mxu0 %v291
      %424 = vmatpush.bf16.msra.mxu0 %v287
      %425 = vmatpush.bf16.msra.mxu0 %v283
      %426 = vmatpush.bf16.msra.mxu0 %v279
      %427 = vmatmul.bf16.gmra.mxu0 %v174
      %v428 = vpop.f32.mrf.mxu0
      %v429 = vadd.f32 %v377, %v428
      %v430 = vpop.f32.mrf.mxu0
      %431 = vdwg.mxu0
      %432 = vmatpush.bf16.msra.mxu0 %v308
      %433 = vmatpush.bf16.msra.mxu0 %v304
      %434 = vmatpush.bf16.msra.mxu0 %v300
      %435 = vmatpush.bf16.msra.mxu0 %v296
      %436 = vmatpush.bf16.msra.mxu0 %v292
      %437 = vmatpush.bf16.msra.mxu0 %v288
      %438 = vmatpush.bf16.msra.mxu0 %v284
      %439 = vmatpush.bf16.msra.mxu0 %v280
      %440 = vmatmul.bf16.gmra.mxu0 %v174
      %v441 = vpop.f32.mrf.mxu0
      %v442 = vadd.f32 %v390, %v441
      %v443 = vpop.f32.mrf.mxu0
      %444 = vdwg.mxu0
      %445 = vmatpush.bf16.msra.mxu0 %v305
      %446 = vmatpush.bf16.msra.mxu0 %v301
      %447 = vmatpush.bf16.msra.mxu0 %v297
      %448 = vmatpush.bf16.msra.mxu0 %v293
      %449 = vmatpush.bf16.msra.mxu0 %v289
      %450 = vmatpush.bf16.msra.mxu0 %v285
      %451 = vmatpush.bf16.msra.mxu0 %v281
      %452 = vmatpush.bf16.msra.mxu0 %v277
      %453 = vmatmul.bf16.gmra.mxu0 %v180
      %v454 = vpop.f32.mrf.mxu0
      %v455 = vadd.f32 0.0, %v454
      %v456 = vpop.f32.mrf.mxu0
      %457 = vdwg.mxu0
      %458 = vmatpush.bf16.msra.mxu0 %v306
      %459 = vmatpush.bf16.msra.mxu0 %v302
      %460 = vmatpush.bf16.msra.mxu0 %v298
      %461 = vmatpush.bf16.msra.mxu0 %v294
      %462 = vmatpush.bf16.msra.mxu0 %v290
      %463 = vmatpush.bf16.msra.mxu0 %v286
      %464 = vmatpush.bf16.msra.mxu0 %v282
      %465 = vmatpush.bf16.msra.mxu0 %v278
      %466 = vmatmul.bf16.gmra.mxu0 %v180
      %v467 = vpop.f32.mrf.mxu0
      %v468 = vadd.f32 0.0, %v467
      %v469 = vpop.f32.mrf.mxu0
      %470 = vdwg.mxu0
      %471 = vmatpush.bf16.msra.mxu0 %v307
      %472 = vmatpush.bf16.msra.mxu0 %v303
      %473 = vmatpush.bf16.msra.mxu0 %v299
      %474 = vmatpush.bf16.msra.mxu0 %v295
      %475 = vmatpush.bf16.msra.mxu0 %v291
      %476 = vmatpush.bf16.msra.mxu0 %v287
      %477 = vmatpush.bf16.msra.mxu0 %v283
      %478 = vmatpush.bf16.msra.mxu0 %v279
      %479 = vmatmul.bf16.gmra.mxu0 %v180
      %v480 = vpop.f32.mrf.mxu0
      %v481 = vadd.f32 0.0, %v480
      %v482 = vpop.f32.mrf.mxu0
      %483 = vdwg.mxu0
      %484 = vmatpush.bf16.msra.mxu0 %v308
      %485 = vmatpush.bf16.msra.mxu0 %v304
      %486 = vmatpush.bf16.msra.mxu0 %v300
      %487 = vmatpush.bf16.msra.mxu0 %v296
      %488 = vmatpush.bf16.msra.mxu0 %v292
      %489 = vmatpush.bf16.msra.mxu0 %v288
      %490 = vmatpush.bf16.msra.mxu0 %v284
      %491 = vmatpush.bf16.msra.mxu0 %v280
      %492 = vmatmul.bf16.gmra.mxu0 %v180
      %v493 = vpop.f32.mrf.mxu0
      %v494 = vadd.f32 0.0, %v493
      %v495 = vpop.f32.mrf.mxu0
      %496 = vdwg.mxu0
      %v497 = vadd.f32 %v403, %v455
      %v498 = vadd.f32 %v416, %v468
      %v499 = vadd.f32 %v429, %v481
      %v500 = vadd.f32 %v442, %v494
      %501 = vst [vmem:[%s140] sm:$0xff] %v497
      %502 = vst [vmem:[%s140 + $0x8] sm:$0xff] %v498
      %503 = vst [vmem:[%s140 + $0x10] sm:$0xff] %v499
      %504 = vst [vmem:[%s140 + $0x18] sm:$0xff] %v500
      %p505 = scmp.lt.s32.totalorder %s13, 1
      %s506 = scalar_select %p505, %s13, 1
      %s507 = smul.addr %s506, 4
      %s508 = smul.addr %s507, 8
      %s509 = scalar_lea.vmem %s2, %s508
      // Predicated region
      $region29: #{a_call__.1} parent=27 // pred_check
        %p510 = pneg %p78
      $region30: #{a_call__.1} parent=27 // pred_check_branch
        %512 = sbr.rel (%p510) target = $region32
      $region31: #{a_call__.1} parent=27 // pred_region
        _
      $region32: #{a_call__.1} parent=27 // pred_fallthru
        _
    $region28: #{a_call__.1} parent=5 // pred_fallthru
      _
    %p513 = scmp.le.s32.totalorder 2, %s8
    // Predicated region
    $region33: #{a_call__.1} parent=5 // pred_check
      %p514 = pneg %p513
    $region34: #{a_call__.1} parent=5 // pred_check_branch
      %516 = sbr.rel (%p514) target = $region36
    $region35: #{a_call__.1} parent=5 // pred_region
      %s517 = ssub.s32 %s8, 2
      // Predicated region
      $region37: #{a_call__.1} parent=35 // pred_check
        %p518 = pneg %p84
      $region38: #{a_call__.1} parent=35 // pred_check_branch
        %520 = sbr.rel (%p518) target = $region40
      $region39: #{a_call__.1} parent=35 // pred_region
        %p521 = scmp.lt.s32.totalorder %s14, 1
        %s522 = scalar_select %p521, %s14, 1
        %s523 = smul.addr %s522, 4
        %s524 = smul.addr %s523, 8
        %s525 = scalar_lea.vmem %s2, %s524
      $region40: #{a_call__.1} parent=35 // pred_fallthru
        _
    $region36: #{a_call__.1} parent=5 // pred_fallthru
      _
  $region6: #{a_call__.1} parent=0 // loop_footer
    %s12 = sadd.s32 1, %s8
  $region7: #{a_call__.1} parent=0 // loop_footer_branch
    %7 = sbr.rel target = $region3
  $region8: #{a_call__.1} parent=0 // loop_exit
    _

</llo_original>
